<compile_context>
chip_gen: v7x
topology: tpu7x:2x2x1
jax: 0.10.0
libtpu: 0.0.40
codegen_flags: <defaults>
</compile_context>

<pallas_src>
import functools

import jax
import jax.numpy as jnp
from jax.experimental import pallas as pl
from jax.experimental.pallas import tpu as pltpu


def _round_up(n, m):
    return ((n + m - 1) // m) * m


def _encoder_kernel(x_ref, w1_ref, b1_ref, w2_ref, b2_ref, w3_ref, b3_ref,
                    o_ref):
    # Layer 1: Linear + ReLU  (weights already transposed: (K, N))
    h = jnp.dot(x_ref[...], w1_ref[...],
                preferred_element_type=jnp.float32) + b1_ref[...]
    h = jnp.maximum(h, 0.0)
    # Layer 2: Linear + ReLU
    h = jnp.dot(h.astype(w2_ref.dtype), w2_ref[...],
                preferred_element_type=jnp.float32) + b2_ref[...]
    h = jnp.maximum(h, 0.0)
    # Layer 3: Linear + ReLU
    h = jnp.dot(h.astype(w3_ref.dtype), w3_ref[...],
                preferred_element_type=jnp.float32) + b3_ref[...]
    o_ref[...] = jnp.maximum(h, 0.0).astype(o_ref.dtype)


@functools.partial(jax.jit,
                   static_argnames=("output_size", "compute_dtype", "tile_m"))
def encoder_forward(x, params, *, output_size, compute_dtype=jnp.float32,
                    tile_m=512):
    """x: (..., input_size). Returns (..., output_size) in float32.

    compute_dtype: dtype fed to the MXU dots (jnp.float32 or jnp.bfloat16).
    Accumulation, bias add and ReLU are always float32.
    """
    w1, b1, w2, b2, w3, b3 = params
    s = x.shape
    input_size = s[-1]
    hidden = w1.shape[0]

    x2d = x.reshape(-1, input_size)          # (M, input_size)
    M = x2d.shape[0]

    # Lane-dense padded feature dims (multiples of 128).
    in_p = _round_up(input_size, 128)
    hid_p = _round_up(hidden, 128)
    out_p = _round_up(output_size, 128)

    # Row tile: 8-aligned; cap at tile_m; pad M so every grid step is full.
    tm = min(tile_m, _round_up(M, 8))
    m_p = _round_up(M, tm)

    cd = compute_dtype
    x_p = jnp.zeros((m_p, in_p), cd).at[:M, :input_size].set(x2d.astype(cd))

    # Pre-transpose + zero-pad weights once (outside the kernel).
    def pad_wt(w, rows, cols):
        return (jnp.zeros((rows, cols), cd)
                .at[:w.shape[1], :w.shape[0]].set(w.T.astype(cd)))

    w1t = pad_wt(w1, in_p, hid_p)            # (in_p,  hid_p)
    w2t = pad_wt(w2, hid_p, hid_p)           # (hid_p, hid_p)
    w3t = pad_wt(w3, hid_p, out_p)           # (hid_p, out_p)
    b1r = jnp.zeros((1, hid_p), jnp.float32).at[0, :hidden].set(b1)
    b2r = jnp.zeros((1, hid_p), jnp.float32).at[0, :hidden].set(b2)
    b3r = jnp.zeros((1, out_p), jnp.float32).at[0, :output_size].set(b3)

    grid = (m_p // tm,)
    const2 = lambda i: (0, 0)                # weights/biases: resident blocks

    out2d = pl.pallas_call(
        _encoder_kernel,
        out_shape=jax.ShapeDtypeStruct((m_p, out_p), jnp.float32),
        grid=grid,
        in_specs=[
            pl.BlockSpec((tm, in_p), lambda i: (i, 0)),
            pl.BlockSpec((in_p, hid_p), const2),
            pl.BlockSpec((1, hid_p), const2),
            pl.BlockSpec((hid_p, hid_p), const2),
            pl.BlockSpec((1, hid_p), const2),
            pl.BlockSpec((hid_p, out_p), const2),
            pl.BlockSpec((1, out_p), const2),
        ],
        out_specs=pl.BlockSpec((tm, out_p), lambda i: (i, 0)),
        compiler_params=pltpu.CompilerParams(
            dimension_semantics=("parallel",),
            vmem_limit_bytes=64 * 1024 * 1024,
        ),
    )(x_p, w1t, b1r, w2t, b2r, w3t, b3r)

    return out2d[:M, :output_size].reshape(list(s[:-1]) + [output_size])


def init_encoder_params(key, input_size, hidden_size, output_size):
    """Deterministic PyTorch-Linear-style init (uniform +-1/sqrt(fan_in))."""
    ks = jax.random.split(key, 6)

    def linear(kw, kb, fan_in, fan_out):
        bound = 1.0 / jnp.sqrt(fan_in)
        w = jax.random.uniform(kw, (fan_out, fan_in), jnp.float32,
                               -bound, bound)
        b = jax.random.uniform(kb, (fan_out,), jnp.float32, -bound, bound)
        return w, b

    w1, b1 = linear(ks[0], ks[1], input_size, hidden_size)
    w2, b2 = linear(ks[2], ks[3], hidden_size, hidden_size)
    w3, b3 = linear(ks[4], ks[5], hidden_size, output_size)
    return (w1, b1, w2, b2, w3, b3)


def _reference_forward(x, params, output_size):
    w1, b1, w2, b2, w3, b3 = params
    s = x.shape
    h = x.reshape(-1, s[-1])
    h = jnp.maximum(h @ w1.T + b1, 0.0)
    h = jnp.maximum(h @ w2.T + b2, 0.0)
    h = jnp.maximum(h @ w3.T + b3, 0.0)
    return h.reshape(list(s[:-1]) + [output_size])


if __name__ == "__main__":
    input_size, hidden_size, output_size = 32, 64, 16
    batch, seq = 2, 8

    key = jax.random.PRNGKey(0)
    kx, kp = jax.random.split(key)
    x = jax.random.normal(kx, (batch, seq, input_size), dtype=jnp.float32)
    params = init_encoder_params(kp, input_size, hidden_size, output_size)

    out = encoder_forward(x, params, output_size=output_size)
    out = jax.block_until_ready(out)

    ref = _reference_forward(x, params, output_size)
    assert out.shape == (batch, seq, output_size), out.shape
    assert jnp.allclose(out, ref, atol=1e-5, rtol=1e-5), "mismatch vs reference"

    print("KERNEL_OK")
</pallas_src>

<mosaic_0001>
module attributes {stable_mosaic.version = 11 : i64} {
  func.func @_encoder_kernel(%arg0: i32, %arg1: memref<16x128xf32, #tpu.memory_space<vmem>>, %arg2: memref<128x128xf32, #tpu.memory_space<vmem>>, %arg3: memref<1x128xf32, #tpu.memory_space<vmem>>, %arg4: memref<128x128xf32, #tpu.memory_space<vmem>>, %arg5: memref<1x128xf32, #tpu.memory_space<vmem>>, %arg6: memref<128x128xf32, #tpu.memory_space<vmem>>, %arg7: memref<1x128xf32, #tpu.memory_space<vmem>>, %arg8: memref<16x128xf32, #tpu.memory_space<vmem>>) attributes {dimension_semantics = [#tpu.dimension_semantics<parallel>], iteration_bounds = array<i64: 1>, scalar_prefetch = 0 : i64, scratch_operands = 0 : i64, tpu.core_type = #tpu.core_type<tc>, window_params = [{transform_indices = @transform_0, window_bounds = array<i64: 16, 128>}, {pipeline_mode = #tpu.pipeline_mode<synchronous>, transform_indices = @transform_1, window_bounds = array<i64: 128, 128>}, {pipeline_mode = #tpu.pipeline_mode<synchronous>, transform_indices = @transform_2, window_bounds = array<i64: 1, 128>}, {pipeline_mode = #tpu.pipeline_mode<synchronous>, transform_indices = @transform_3, window_bounds = array<i64: 128, 128>}, {pipeline_mode = #tpu.pipeline_mode<synchronous>, transform_indices = @transform_4, window_bounds = array<i64: 1, 128>}, {pipeline_mode = #tpu.pipeline_mode<synchronous>, transform_indices = @transform_5, window_bounds = array<i64: 128, 128>}, {pipeline_mode = #tpu.pipeline_mode<synchronous>, transform_indices = @transform_6, window_bounds = array<i64: 1, 128>}, {transform_indices = @transform_7, window_bounds = array<i64: 16, 128>}]} {
    %c0 = arith.constant 0 : index
    %c0_0 = arith.constant 0 : index
    %0 = vector.load %arg1[%c0, %c0_0] : memref<16x128xf32, #tpu.memory_space<vmem>>, vector<16x128xf32>
    %c0_1 = arith.constant 0 : index
    %c0_2 = arith.constant 0 : index
    %1 = vector.load %arg2[%c0_1, %c0_2] : memref<128x128xf32, #tpu.memory_space<vmem>>, vector<128x128xf32>
    %cst = arith.constant dense<0.000000e+00> : vector<16x128xf32>
    %2 = tpu.matmul %0, %1, %cst {dimension_numbers = #tpu.dot_dimension_numbers<[1], [0], [0], [1], [0, 0, 1, 1], [], []>} : vector<16x128xf32>, vector<128x128xf32>, vector<16x128xf32> -> vector<16x128xf32>
    %c0_3 = arith.constant 0 : index
    %c0_4 = arith.constant 0 : index
    %3 = vector.load %arg3[%c0_3, %c0_4] : memref<1x128xf32, #tpu.memory_space<vmem>>, vector<1x128xf32>
    %4 = vector.broadcast %3 : vector<1x128xf32> to vector<16x128xf32>
    %5 = arith.addf %2, %4 : vector<16x128xf32>
    %cst_5 = arith.constant 0.000000e+00 : f32
    %6 = vector.broadcast %cst_5 : f32 to vector<16x128xf32>
    %7 = arith.maximumf %5, %6 : vector<16x128xf32>
    %c0_6 = arith.constant 0 : index
    %c0_7 = arith.constant 0 : index
    %8 = vector.load %arg4[%c0_6, %c0_7] : memref<128x128xf32, #tpu.memory_space<vmem>>, vector<128x128xf32>
    %cst_8 = arith.constant dense<0.000000e+00> : vector<16x128xf32>
    %9 = tpu.matmul %7, %8, %cst_8 {dimension_numbers = #tpu.dot_dimension_numbers<[1], [0], [0], [1], [0, 0, 1, 1], [], []>} : vector<16x128xf32>, vector<128x128xf32>, vector<16x128xf32> -> vector<16x128xf32>
    %c0_9 = arith.constant 0 : index
    %c0_10 = arith.constant 0 : index
    %10 = vector.load %arg5[%c0_9, %c0_10] : memref<1x128xf32, #tpu.memory_space<vmem>>, vector<1x128xf32>
    %11 = vector.broadcast %10 : vector<1x128xf32> to vector<16x128xf32>
    %12 = arith.addf %9, %11 : vector<16x128xf32>
    %cst_11 = arith.constant 0.000000e+00 : f32
    %13 = vector.broadcast %cst_11 : f32 to vector<16x128xf32>
    %14 = arith.maximumf %12, %13 : vector<16x128xf32>
    %c0_12 = arith.constant 0 : index
    %c0_13 = arith.constant 0 : index
    %15 = vector.load %arg6[%c0_12, %c0_13] : memref<128x128xf32, #tpu.memory_space<vmem>>, vector<128x128xf32>
    %cst_14 = arith.constant dense<0.000000e+00> : vector<16x128xf32>
    %16 = tpu.matmul %14, %15, %cst_14 {dimension_numbers = #tpu.dot_dimension_numbers<[1], [0], [0], [1], [0, 0, 1, 1], [], []>} : vector<16x128xf32>, vector<128x128xf32>, vector<16x128xf32> -> vector<16x128xf32>
    %c0_15 = arith.constant 0 : index
    %c0_16 = arith.constant 0 : index
    %17 = vector.load %arg7[%c0_15, %c0_16] : memref<1x128xf32, #tpu.memory_space<vmem>>, vector<1x128xf32>
    %18 = vector.broadcast %17 : vector<1x128xf32> to vector<16x128xf32>
    %19 = arith.addf %16, %18 : vector<16x128xf32>
    %cst_17 = arith.constant 0.000000e+00 : f32
    %20 = vector.broadcast %cst_17 : f32 to vector<16x128xf32>
    %21 = arith.maximumf %19, %20 : vector<16x128xf32>
    %c0_18 = arith.constant 0 : index
    %c0_19 = arith.constant 0 : index
    %22 = vector.load %arg8[%c0_18, %c0_19] : memref<16x128xf32, #tpu.memory_space<vmem>>, vector<16x128xf32>
    tpu.vector_store %arg8[%c0_18, %c0_19], %21 {strides = array<i32>} : memref<16x128xf32, #tpu.memory_space<vmem>>, vector<16x128xf32>,
    return
  }
  func.func @transform_0(%arg0: i32) -> (i32, i32) {
    %c0_i32 = arith.constant 0 : i32
    %c0_i32_0 = arith.constant 0 : i32
    return %arg0, %c0_i32 : i32, i32
  }
  func.func @transform_1(%arg0: i32) -> (i32, i32) {
    %c0_i32 = arith.constant 0 : i32
    %c0_i32_0 = arith.constant 0 : i32
    %c0_i32_1 = arith.constant 0 : i32
    return %c0_i32, %c0_i32_0 : i32, i32
  }
  func.func @transform_2(%arg0: i32) -> (i32, i32) {
    %c0_i32 = arith.constant 0 : i32
    %c0_i32_0 = arith.constant 0 : i32
    %c0_i32_1 = arith.constant 0 : i32
    return %c0_i32, %c0_i32_0 : i32, i32
  }
  func.func @transform_3(%arg0: i32) -> (i32, i32) {
    %c0_i32 = arith.constant 0 : i32
    %c0_i32_0 = arith.constant 0 : i32
    %c0_i32_1 = arith.constant 0 : i32
    return %c0_i32, %c0_i32_0 : i32, i32
  }
  func.func @transform_4(%arg0: i32) -> (i32, i32) {
    %c0_i32 = arith.constant 0 : i32
    %c0_i32_0 = arith.constant 0 : i32
    %c0_i32_1 = arith.constant 0 : i32
    return %c0_i32, %c0_i32_0 : i32, i32
  }
  func.func @transform_5(%arg0: i32) -> (i32, i32) {
    %c0_i32 = arith.constant 0 : i32
    %c0_i32_0 = arith.constant 0 : i32
    %c0_i32_1 = arith.constant 0 : i32
    return %c0_i32, %c0_i32_0 : i32, i32
  }
  func.func @transform_6(%arg0: i32) -> (i32, i32) {
    %c0_i32 = arith.constant 0 : i32
    %c0_i32_0 = arith.constant 0 : i32
    %c0_i32_1 = arith.constant 0 : i32
    return %c0_i32, %c0_i32_0 : i32, i32
  }
  func.func @transform_7(%arg0: i32) -> (i32, i32) {
    %c0_i32 = arith.constant 0 : i32
    %c0_i32_0 = arith.constant 0 : i32
    return %arg0, %c0_i32 : i32, i32
  }
}

</mosaic_0001>

<llo_original>
// kernel: encoder_forward.1
$region0: #{encoder_forward.1}
  #allocation0 [shape = 'u32[]', space=smem, size = 0x4, offset = 0x4, fixed_abs, tag = 'smem constant byte address 0x4 - core index']
  #allocation1 [shape = 'u32[144,128]{1,0:T(1,128)}', space=vmem, size = 0x12000, scoped, tag = 'internal scratch']
  %s0 = inlined_call_operand.hbm [shape: f32[16,128], index: 0, kind: input, shape index: {}]
  %s1 = inlined_call_operand.hbm [shape: f32[128,128], index: 1, kind: input, shape index: {}]
  %s2 = inlined_call_operand.hbm [shape: f32[1,128], index: 2, kind: input, shape index: {}]
  %s3 = inlined_call_operand.hbm [shape: f32[128,128], index: 3, kind: input, shape index: {}]
  %s4 = inlined_call_operand.hbm [shape: f32[1,128], index: 4, kind: input, shape index: {}]
  %s5 = inlined_call_operand.hbm [shape: f32[128,128], index: 5, kind: input, shape index: {}]
  %s6 = inlined_call_operand.hbm [shape: f32[1,128], index: 6, kind: input, shape index: {}]
  %s7 = inlined_call_operand.hbm [shape: f32[16,128], index: 7, kind: output, shape index: {}]
  %s8 = sld [smem:[#allocation0]]
  $region66: #{encoder_forward.1} parent=0
    _
  %s10 = ssub.s32 1, %s8
  %s11 = scalar_select 0, %s10, %s8
  $region1: #{encoder_forward.1} parent=0
    #allocation2 [shape = 'u8[8192]{0}', space=vmem, size = 0x2000, scoped, tag = 'input window, operand 0, single buffered']
    #allocation3 [shape = 's32[1]{0}', space=sflag, size = 0x4, scoped, tag = 'scoped memory for encoder_forward.1']
    #allocation4 [shape = 's32[1]{0}', space=sflag, size = 0x4, scoped, tag = 'scoped memory for encoder_forward.1']
    #allocation5 [shape = 'u8[65536]{0}', space=vmem, size = 0x10000, scoped, tag = 'input window, operand 1, single buffered']
    #allocation6 [shape = 's32[1]{0}', space=sflag, size = 0x4, scoped, tag = 'scoped memory for encoder_forward.1']
    #allocation7 [shape = 'u8[512]{0}', space=vmem, size = 0x400, scoped, tag = 'input window, operand 2, single buffered']
    #allocation8 [shape = 'u8[65536]{0}', space=vmem, size = 0x10000, scoped, tag = 'input window, operand 3, single buffered']
    #allocation9 [shape = 's32[1]{0}', space=sflag, size = 0x4, scoped, tag = 'scoped memory for encoder_forward.1']
    #allocation10 [shape = 'u8[512]{0}', space=vmem, size = 0x400, scoped, tag = 'input window, operand 4, single buffered']
    #allocation11 [shape = 'u8[65536]{0}', space=vmem, size = 0x10000, scoped, tag = 'input window, operand 5, single buffered']
    #allocation12 [shape = 's32[1]{0}', space=sflag, size = 0x4, scoped, tag = 'scoped memory for encoder_forward.1']
    #allocation13 [shape = 'u8[512]{0}', space=vmem, size = 0x400, scoped, tag = 'input window, operand 6, single buffered']
    #allocation14 [shape = 'u8[8192]{0}', space=vmem, size = 0x2000, scoped, tag = 'output window, operand 0, single buffered']
    %12 = vsyncpa [#allocation3], 0
    %13 = vsyncpa [#allocation6], 0
    %14 = vsyncpa [#allocation9], 0
    %15 = vsyncpa [#allocation12], 0
    %16 = vsyncpa [#allocation4], 0
    // Predicated region
    $region2: #{encoder_forward.1} parent=1 // pred_check
      _
    $region3: #{encoder_forward.1} parent=1 // pred_check_branch
      %18 = sbr.rel (0) target = $region5
    $region4: #{encoder_forward.1} parent=1 // pred_region
      %s20 = ssub.s32 256, 256
      %21 = vsyncadd [#allocation3], %s20
      %s22 = sshll.u32 [#allocation2], 4
      %s23 = int_to_ptr.vmem [resolvable:$true] %s22
      %28 = dma.hbm_to_vmem [thread:$0]  %s0, 256, %s23, [#allocation3], 128, 128, 8
    $region5: #{encoder_forward.1} parent=1 // pred_fallthru
      _
    // Predicated region
    $region6: #{encoder_forward.1} parent=1 // pred_check
      _
    $region7: #{encoder_forward.1} parent=1 // pred_check_branch
      %30 = sbr.rel (0) target = $region9
    $region8: #{encoder_forward.1} parent=1 // pred_region
      %s32 = ssub.s32 2048, 2048
      %33 = vsyncadd [#allocation6], %s32
      %s34 = sshll.u32 [#allocation5], 4
      %s35 = int_to_ptr.vmem [resolvable:$true] %s34
      %40 = dma.hbm_to_vmem [thread:$0]  %s1, 2048, %s35, [#allocation6], 128, 128, 8
    $region9: #{encoder_forward.1} parent=1 // pred_fallthru
      _
    // Predicated region
    $region10: #{encoder_forward.1} parent=1 // pred_check
      _
    $region11: #{encoder_forward.1} parent=1 // pred_check_branch
      %42 = sbr.rel (0) target = $region13
    $region12: #{encoder_forward.1} parent=1 // pred_region
      %s44 = ssub.s32 16, 16
      %45 = vsyncadd [#allocation6], %s44
      %s47 = sshll.u32 [#allocation7], 4
      %s48 = int_to_ptr.vmem [resolvable:$true] %s47
      %50 = dma.hbm_to_vmem [thread:$0]  %s2, 16, %s48, [#allocation6]
    $region13: #{encoder_forward.1} parent=1 // pred_fallthru
      _
    // Predicated region
    $region14: #{encoder_forward.1} parent=1 // pred_check
      _
    $region15: #{encoder_forward.1} parent=1 // pred_check_branch
      %52 = sbr.rel (0) target = $region17
    $region16: #{encoder_forward.1} parent=1 // pred_region
      %s54 = ssub.s32 2048, 2048
      %55 = vsyncadd [#allocation9], %s54
      %s56 = sshll.u32 [#allocation8], 4
      %s57 = int_to_ptr.vmem [resolvable:$true] %s56
      %62 = dma.hbm_to_vmem [thread:$0]  %s3, 2048, %s57, [#allocation9], 128, 128, 8
    $region17: #{encoder_forward.1} parent=1 // pred_fallthru
      _
    // Predicated region
    $region18: #{encoder_forward.1} parent=1 // pred_check
      _
    $region19: #{encoder_forward.1} parent=1 // pred_check_branch
      %64 = sbr.rel (0) target = $region21
    $region20: #{encoder_forward.1} parent=1 // pred_region
      %s66 = ssub.s32 16, 16
      %67 = vsyncadd [#allocation9], %s66
      %s69 = sshll.u32 [#allocation10], 4
      %s70 = int_to_ptr.vmem [resolvable:$true] %s69
      %72 = dma.hbm_to_vmem [thread:$0]  %s4, 16, %s70, [#allocation9]
    $region21: #{encoder_forward.1} parent=1 // pred_fallthru
      _
    // Predicated region
    $region22: #{encoder_forward.1} parent=1 // pred_check
      _
    $region23: #{encoder_forward.1} parent=1 // pred_check_branch
      %74 = sbr.rel (0) target = $region25
    $region24: #{encoder_forward.1} parent=1 // pred_region
      %s76 = ssub.s32 2048, 2048
      %77 = vsyncadd [#allocation12], %s76
      %s78 = sshll.u32 [#allocation11], 4
      %s79 = int_to_ptr.vmem [resolvable:$true] %s78
      %84 = dma.hbm_to_vmem [thread:$0]  %s5, 2048, %s79, [#allocation12], 128, 128, 8
    $region25: #{encoder_forward.1} parent=1 // pred_fallthru
      _
    // Predicated region
    $region26: #{encoder_forward.1} parent=1 // pred_check
      _
    $region27: #{encoder_forward.1} parent=1 // pred_check_branch
      %86 = sbr.rel (0) target = $region29
    $region28: #{encoder_forward.1} parent=1 // pred_region
      %s88 = ssub.s32 16, 16
      %89 = vsyncadd [#allocation12], %s88
      %s91 = sshll.u32 [#allocation13], 4
      %s92 = int_to_ptr.vmem [resolvable:$true] %s91
      %94 = dma.hbm_to_vmem [thread:$0]  %s6, 16, %s92, [#allocation12]
    $region29: #{encoder_forward.1} parent=1 // pred_fallthru
      _
    // Predicated region
    $region30: #{encoder_forward.1} parent=1 // pred_check
      _
    $region31: #{encoder_forward.1} parent=1 // pred_check_branch
      %96 = sbr.rel (0) target = $region33
    $region32: #{encoder_forward.1} parent=1 // pred_region
      %97 = dma.done [#allocation3], 256
    $region33: #{encoder_forward.1} parent=1 // pred_fallthru
      _
    // Predicated region
    $region34: #{encoder_forward.1} parent=1 // pred_check
      _
    $region35: #{encoder_forward.1} parent=1 // pred_check_branch
      %99 = sbr.rel (0) target = $region37
    $region36: #{encoder_forward.1} parent=1 // pred_region
      %100 = dma.done [#allocation6], 2048
    $region37: #{encoder_forward.1} parent=1 // pred_fallthru
      _
    // Predicated region
    $region38: #{encoder_forward.1} parent=1 // pred_check
      _
    $region39: #{encoder_forward.1} parent=1 // pred_check_branch
      %102 = sbr.rel (0) target = $region41
    $region40: #{encoder_forward.1} parent=1 // pred_region
      %103 = dma.done [#allocation6], 16
    $region41: #{encoder_forward.1} parent=1 // pred_fallthru
      _
    // Predicated region
    $region42: #{encoder_forward.1} parent=1 // pred_check
      _
    $region43: #{encoder_forward.1} parent=1 // pred_check_branch
      %105 = sbr.rel (0) target = $region45
    $region44: #{encoder_forward.1} parent=1 // pred_region
      %106 = dma.done [#allocation9], 2048
    $region45: #{encoder_forward.1} parent=1 // pred_fallthru
      _
    // Predicated region
    $region46: #{encoder_forward.1} parent=1 // pred_check
      _
    $region47: #{encoder_forward.1} parent=1 // pred_check_branch
      %108 = sbr.rel (0) target = $region49
    $region48: #{encoder_forward.1} parent=1 // pred_region
      %109 = dma.done [#allocation9], 16
    $region49: #{encoder_forward.1} parent=1 // pred_fallthru
      _
    // Predicated region
    $region50: #{encoder_forward.1} parent=1 // pred_check
      _
    $region51: #{encoder_forward.1} parent=1 // pred_check_branch
      %111 = sbr.rel (0) target = $region53
    $region52: #{encoder_forward.1} parent=1 // pred_region
      %112 = dma.done [#allocation12], 2048
    $region53: #{encoder_forward.1} parent=1 // pred_fallthru
      _
    // Predicated region
    $region54: #{encoder_forward.1} parent=1 // pred_check
      _
    $region55: #{encoder_forward.1} parent=1 // pred_check_branch
      %114 = sbr.rel (0) target = $region57
    $region56: #{encoder_forward.1} parent=1 // pred_region
      %115 = dma.done [#allocation12], 16
    $region57: #{encoder_forward.1} parent=1 // pred_fallthru
      _
    %v116 = vld [vmem:[#allocation2] sm:$0xff]
    %v117 = vld [vmem:[#allocation2 + $0x8] sm:$0xff]
    %v118 = vld [vmem:[#allocation5] sm:$0xff]
    %v119 = vld [vmem:[#allocation5 + $0x8] sm:$0xff]
    %v120 = vld [vmem:[#allocation5 + $0x10] sm:$0xff]
    %v121 = vld [vmem:[#allocation5 + $0x18] sm:$0xff]
    %v122 = vld [vmem:[#allocation5 + $0x20] sm:$0xff]
    %v123 = vld [vmem:[#allocation5 + $0x28] sm:$0xff]
    %v124 = vld [vmem:[#allocation5 + $0x30] sm:$0xff]
    %v125 = vld [vmem:[#allocation5 + $0x38] sm:$0xff]
    %v126 = vld [vmem:[#allocation5 + $0x40] sm:$0xff]
    %v127 = vld [vmem:[#allocation5 + $0x48] sm:$0xff]
    %v128 = vld [vmem:[#allocation5 + $0x50] sm:$0xff]
    %v129 = vld [vmem:[#allocation5 + $0x58] sm:$0xff]
    %v130 = vld [vmem:[#allocation5 + $0x60] sm:$0xff]
    %v131 = vld [vmem:[#allocation5 + $0x68] sm:$0xff]
    %v132 = vld [vmem:[#allocation5 + $0x70] sm:$0xff]
    %v133 = vld [vmem:[#allocation5 + $0x78] sm:$0xff]
    %v134 = vld [vmem:[#allocation7] sm:$0x1]
    %v136 = vlaneseq
    %v137 = vshrl.u32 %v136, 7
    %v138 = vsub.s32 0, %v137
    %v139 = vrot.slane %v134, %v138
    %141 = vmatprep.subr.mxu0 0.0
    %142 = vmatpush1.msra.mxu0 %v118
    %143 = vmatprep.subr.mxu0 0.0
    %144 = vmatpush1.msra.mxu0 %v119
    %145 = vmatprep.subr.mxu0 0.0
    %146 = vmatpush1.msra.mxu0 %v120
    %147 = vmatprep.subr.mxu0 0.0
    %148 = vmatpush1.msra.mxu0 %v121
    %149 = vmatprep.subr.mxu0 0.0
    %150 = vmatpush1.msra.mxu0 %v122
    %151 = vmatprep.subr.mxu0 0.0
    %152 = vmatpush1.msra.mxu0 %v123
    %153 = vmatprep.subr.mxu0 0.0
    %154 = vmatpush1.msra.mxu0 %v124
    %155 = vmatprep.subr.mxu0 0.0
    %156 = vmatpush1.msra.mxu0 %v125
    %157 = vmatprep.subr.mxu0 0.0
    %158 = vmatpush1.msra.mxu0 %v126
    %159 = vmatprep.subr.mxu0 0.0
    %160 = vmatpush1.msra.mxu0 %v127
    %161 = vmatprep.subr.mxu0 0.0
    %162 = vmatpush1.msra.mxu0 %v128
    %163 = vmatprep.subr.mxu0 0.0
    %164 = vmatpush1.msra.mxu0 %v129
    %165 = vmatprep.subr.mxu0 0.0
    %166 = vmatpush1.msra.mxu0 %v130
    %167 = vmatprep.subr.mxu0 0.0
    %168 = vmatpush1.msra.mxu0 %v131
    %169 = vmatprep.subr.mxu0 0.0
    %170 = vmatpush1.msra.mxu0 %v132
    %171 = vmatprep.subr.mxu0 0.0
    %172 = vmatpush1.msra.mxu0 %v133
    %173 = vmatprep.subr.mxu0 0.0
    %174 = vmatpush1.msra.mxu0 0.0
    %175 = vmatprep.subr.mxu0 0.0
    %176 = vmatpush1.msra.mxu0 0.0
    %177 = vmatprep.subr.mxu0 0.0
    %178 = vmatpush1.msra.mxu0 0.0
    %179 = vmatprep.subr.mxu0 0.0
    %180 = vmatpush1.msra.mxu0 0.0
    %181 = vmatprep.subr.mxu0 0.0
    %182 = vmatpush1.msra.mxu0 0.0
    %183 = vmatprep.subr.mxu0 0.0
    %184 = vmatpush1.msra.mxu0 0.0
    %185 = vmatprep.subr.mxu0 0.0
    %186 = vmatpush1.msra.mxu0 0.0
    %187 = vmatprep.subr.mxu0 0.0
    %188 = vmatpush1.msra.mxu0 0.0
    %189 = vmatprep.subr.mxu0 0.0
    %190 = vmatpush1.msra.mxu0 0.0
    %191 = vmatprep.subr.mxu0 0.0
    %192 = vmatpush1.msra.mxu0 0.0
    %193 = vmatprep.subr.mxu0 0.0
    %194 = vmatpush1.msra.mxu0 0.0
    %195 = vmatprep.subr.mxu0 0.0
    %196 = vmatpush1.msra.mxu0 0.0
    %197 = vmatprep.subr.mxu0 0.0
    %198 = vmatpush1.msra.mxu0 0.0
    %199 = vmatprep.subr.mxu0 0.0
    %200 = vmatpush1.msra.mxu0 0.0
    %201 = vmatprep.subr.mxu0 0.0
    %202 = vmatpush1.msra.mxu0 0.0
    %203 = vmatprep.subr.mxu0 0.0
    %204 = vmatpush1.msra.mxu0 0.0
    %205 = vmatprep.mubr.f32.mxu0 0.0
    %206 = vmatmul.mubr.f32.gmra.mrb[0].mxu0 %v116
    %v207 = vpop.f32.mrb[0].mxu0
    %v208 = vadd.f32 %v139, %v207
    %v209 = vpop.f32.mrb[0].mxu0
    %210 = vmatprep.mubr.f32.mxu0 0.0
    %211 = vmatmul.mubr.f32.gmra.mrb[0].mxu0 %v117
    %v212 = vpop.f32.mrb[0].mxu0
    %v213 = vadd.f32 %v139, %v212
    %v214 = vpop.f32.mrb[0].mxu0
    %215 = vdwg.mxu0
    %v216 = vmax.f32 %v208, 0.0
    %v217 = vmax.f32 %v213, 0.0
    %v218 = vld [vmem:[#allocation8] sm:$0xff]
    %v219 = vld [vmem:[#allocation8 + $0x8] sm:$0xff]
    %v220 = vld [vmem:[#allocation8 + $0x10] sm:$0xff]
    %v221 = vld [vmem:[#allocation8 + $0x18] sm:$0xff]
    %v222 = vld [vmem:[#allocation8 + $0x20] sm:$0xff]
    %v223 = vld [vmem:[#allocation8 + $0x28] sm:$0xff]
    %v224 = vld [vmem:[#allocation8 + $0x30] sm:$0xff]
    %v225 = vld [vmem:[#allocation8 + $0x38] sm:$0xff]
    %v226 = vld [vmem:[#allocation8 + $0x40] sm:$0xff]
    %v227 = vld [vmem:[#allocation8 + $0x48] sm:$0xff]
    %v228 = vld [vmem:[#allocation8 + $0x50] sm:$0xff]
    %v229 = vld [vmem:[#allocation8 + $0x58] sm:$0xff]
    %v230 = vld [vmem:[#allocation8 + $0x60] sm:$0xff]
    %v231 = vld [vmem:[#allocation8 + $0x68] sm:$0xff]
    %v232 = vld [vmem:[#allocation8 + $0x70] sm:$0xff]
    %v233 = vld [vmem:[#allocation8 + $0x78] sm:$0xff]
    %v234 = vld [vmem:[#allocation10] sm:$0x1]
    %v236 = vlaneseq
    %v237 = vshrl.u32 %v236, 7
    %v238 = vsub.s32 0, %v237
    %v239 = vrot.slane %v234, %v238
    %241 = vmatprep.subr.mxu0 0.0
    %242 = vmatpush1.msra.mxu0 %v218
    %243 = vmatprep.subr.mxu0 0.0
    %244 = vmatpush1.msra.mxu0 %v219
    %245 = vmatprep.subr.mxu0 0.0
    %246 = vmatpush1.msra.mxu0 %v220
    %247 = vmatprep.subr.mxu0 0.0
    %248 = vmatpush1.msra.mxu0 %v221
    %249 = vmatprep.subr.mxu0 0.0
    %250 = vmatpush1.msra.mxu0 %v222
    %251 = vmatprep.subr.mxu0 0.0
    %252 = vmatpush1.msra.mxu0 %v223
    %253 = vmatprep.subr.mxu0 0.0
    %254 = vmatpush1.msra.mxu0 %v224
    %255 = vmatprep.subr.mxu0 0.0
    %256 = vmatpush1.msra.mxu0 %v225
    %257 = vmatprep.subr.mxu0 0.0
    %258 = vmatpush1.msra.mxu0 %v226
    %259 = vmatprep.subr.mxu0 0.0
    %260 = vmatpush1.msra.mxu0 %v227
    %261 = vmatprep.subr.mxu0 0.0
    %262 = vmatpush1.msra.mxu0 %v228
    %263 = vmatprep.subr.mxu0 0.0
    %264 = vmatpush1.msra.mxu0 %v229
    %265 = vmatprep.subr.mxu0 0.0
    %266 = vmatpush1.msra.mxu0 %v230
    %267 = vmatprep.subr.mxu0 0.0
    %268 = vmatpush1.msra.mxu0 %v231
    %269 = vmatprep.subr.mxu0 0.0
    %270 = vmatpush1.msra.mxu0 %v232
    %271 = vmatprep.subr.mxu0 0.0
    %272 = vmatpush1.msra.mxu0 %v233
    %273 = vmatprep.subr.mxu0 0.0
    %274 = vmatpush1.msra.mxu0 0.0
    %275 = vmatprep.subr.mxu0 0.0
    %276 = vmatpush1.msra.mxu0 0.0
    %277 = vmatprep.subr.mxu0 0.0
    %278 = vmatpush1.msra.mxu0 0.0
    %279 = vmatprep.subr.mxu0 0.0
    %280 = vmatpush1.msra.mxu0 0.0
    %281 = vmatprep.subr.mxu0 0.0
    %282 = vmatpush1.msra.mxu0 0.0
    %283 = vmatprep.subr.mxu0 0.0
    %284 = vmatpush1.msra.mxu0 0.0
    %285 = vmatprep.subr.mxu0 0.0
    %286 = vmatpush1.msra.mxu0 0.0
    %287 = vmatprep.subr.mxu0 0.0
    %288 = vmatpush1.msra.mxu0 0.0
    %289 = vmatprep.subr.mxu0 0.0
    %290 = vmatpush1.msra.mxu0 0.0
    %291 = vmatprep.subr.mxu0 0.0
    %292 = vmatpush1.msra.mxu0 0.0
    %293 = vmatprep.subr.mxu0 0.0
    %294 = vmatpush1.msra.mxu0 0.0
    %295 = vmatprep.subr.mxu0 0.0
    %296 = vmatpush1.msra.mxu0 0.0
    %297 = vmatprep.subr.mxu0 0.0
    %298 = vmatpush1.msra.mxu0 0.0
    %299 = vmatprep.subr.mxu0 0.0
    %300 = vmatpush1.msra.mxu0 0.0
    %301 = vmatprep.subr.mxu0 0.0
    %302 = vmatpush1.msra.mxu0 0.0
    %303 = vmatprep.subr.mxu0 0.0
    %304 = vmatpush1.msra.mxu0 0.0
    %305 = vmatprep.mubr.f32.mxu0 0.0
    %306 = vmatmul.mubr.f32.gmra.mrb[0].mxu0 %v216
    %v307 = vpop.f32.mrb[0].mxu0
    %v308 = vadd.f32 %v239, %v307
    %v309 = vpop.f32.mrb[0].mxu0
    %310 = vmatprep.mubr.f32.mxu0 0.0
    %311 = vmatmul.mubr.f32.gmra.mrb[0].mxu0 %v217
    %v312 = vpop.f32.mrb[0].mxu0
    %v313 = vadd.f32 %v239, %v312
    %v314 = vpop.f32.mrb[0].mxu0
    %315 = vdwg.mxu0
    %v316 = vmax.f32 %v308, 0.0
    %v317 = vmax.f32 %v313, 0.0
    %v318 = vld [vmem:[#allocation11] sm:$0xff]
    %v319 = vld [vmem:[#allocation11 + $0x8] sm:$0xff]
    %v320 = vld [vmem:[#allocation11 + $0x10] sm:$0xff]
    %v321 = vld [vmem:[#allocation11 + $0x18] sm:$0xff]
    %v322 = vld [vmem:[#allocation11 + $0x20] sm:$0xff]
    %v323 = vld [vmem:[#allocation11 + $0x28] sm:$0xff]
    %v324 = vld [vmem:[#allocation11 + $0x30] sm:$0xff]
    %v325 = vld [vmem:[#allocation11 + $0x38] sm:$0xff]
    %v326 = vld [vmem:[#allocation11 + $0x40] sm:$0xff]
    %v327 = vld [vmem:[#allocation11 + $0x48] sm:$0xff]
    %v328 = vld [vmem:[#allocation11 + $0x50] sm:$0xff]
    %v329 = vld [vmem:[#allocation11 + $0x58] sm:$0xff]
    %v330 = vld [vmem:[#allocation11 + $0x60] sm:$0xff]
    %v331 = vld [vmem:[#allocation11 + $0x68] sm:$0xff]
    %v332 = vld [vmem:[#allocation11 + $0x70] sm:$0xff]
    %v333 = vld [vmem:[#allocation11 + $0x78] sm:$0xff]
    %v334 = vld [vmem:[#allocation13] sm:$0x1]
    %v336 = vlaneseq
    %v337 = vshrl.u32 %v336, 7
    %v338 = vsub.s32 0, %v337
    %v339 = vrot.slane %v334, %v338
    %341 = vmatprep.subr.mxu0 0.0
    %342 = vmatpush1.msra.mxu0 %v318
    %343 = vmatprep.subr.mxu0 0.0
    %344 = vmatpush1.msra.mxu0 %v319
    %345 = vmatprep.subr.mxu0 0.0
    %346 = vmatpush1.msra.mxu0 %v320
    %347 = vmatprep.subr.mxu0 0.0
    %348 = vmatpush1.msra.mxu0 %v321
    %349 = vmatprep.subr.mxu0 0.0
    %350 = vmatpush1.msra.mxu0 %v322
    %351 = vmatprep.subr.mxu0 0.0
    %352 = vmatpush1.msra.mxu0 %v323
    %353 = vmatprep.subr.mxu0 0.0
    %354 = vmatpush1.msra.mxu0 %v324
    %355 = vmatprep.subr.mxu0 0.0
    %356 = vmatpush1.msra.mxu0 %v325
    %357 = vmatprep.subr.mxu0 0.0
    %358 = vmatpush1.msra.mxu0 %v326
    %359 = vmatprep.subr.mxu0 0.0
    %360 = vmatpush1.msra.mxu0 %v327
    %361 = vmatprep.subr.mxu0 0.0
    %362 = vmatpush1.msra.mxu0 %v328
    %363 = vmatprep.subr.mxu0 0.0
    %364 = vmatpush1.msra.mxu0 %v329
    %365 = vmatprep.subr.mxu0 0.0
    %366 = vmatpush1.msra.mxu0 %v330
    %367 = vmatprep.subr.mxu0 0.0
    %368 = vmatpush1.msra.mxu0 %v331
    %369 = vmatprep.subr.mxu0 0.0
    %370 = vmatpush1.msra.mxu0 %v332
    %371 = vmatprep.subr.mxu0 0.0
    %372 = vmatpush1.msra.mxu0 %v333
    %373 = vmatprep.subr.mxu0 0.0
    %374 = vmatpush1.msra.mxu0 0.0
    %375 = vmatprep.subr.mxu0 0.0
    %376 = vmatpush1.msra.mxu0 0.0
    %377 = vmatprep.subr.mxu0 0.0
    %378 = vmatpush1.msra.mxu0 0.0
    %379 = vmatprep.subr.mxu0 0.0
    %380 = vmatpush1.msra.mxu0 0.0
    %381 = vmatprep.subr.mxu0 0.0
    %382 = vmatpush1.msra.mxu0 0.0
    %383 = vmatprep.subr.mxu0 0.0
    %384 = vmatpush1.msra.mxu0 0.0
    %385 = vmatprep.subr.mxu0 0.0
    %386 = vmatpush1.msra.mxu0 0.0
    %387 = vmatprep.subr.mxu0 0.0
    %388 = vmatpush1.msra.mxu0 0.0
    %389 = vmatprep.subr.mxu0 0.0
    %390 = vmatpush1.msra.mxu0 0.0
    %391 = vmatprep.subr.mxu0 0.0
    %392 = vmatpush1.msra.mxu0 0.0
    %393 = vmatprep.subr.mxu0 0.0
    %394 = vmatpush1.msra.mxu0 0.0
    %395 = vmatprep.subr.mxu0 0.0
    %396 = vmatpush1.msra.mxu0 0.0
    %397 = vmatprep.subr.mxu0 0.0
    %398 = vmatpush1.msra.mxu0 0.0
    %399 = vmatprep.subr.mxu0 0.0
    %400 = vmatpush1.msra.mxu0 0.0
    %401 = vmatprep.subr.mxu0 0.0
    %402 = vmatpush1.msra.mxu0 0.0
    %403 = vmatprep.subr.mxu0 0.0
    %404 = vmatpush1.msra.mxu0 0.0
    %405 = vmatprep.mubr.f32.mxu0 0.0
    %406 = vmatmul.mubr.f32.gmra.mrb[0].mxu0 %v316
    %v407 = vpop.f32.mrb[0].mxu0
    %v408 = vadd.f32 %v339, %v407
    %v409 = vpop.f32.mrb[0].mxu0
    %410 = vmatprep.mubr.f32.mxu0 0.0
    %411 = vmatmul.mubr.f32.gmra.mrb[0].mxu0 %v317
    %v412 = vpop.f32.mrb[0].mxu0
    %v413 = vadd.f32 %v339, %v412
    %v414 = vpop.f32.mrb[0].mxu0
    %415 = vdwg.mxu0
    %v416 = vmax.f32 %v408, 0.0
    %v417 = vmax.f32 %v413, 0.0
    %418 = vst [vmem:[#allocation14] sm:$0xff] %v416
    %419 = vst [vmem:[#allocation14 + $0x8] sm:$0xff] %v417
    // Predicated region
    $region58: #{encoder_forward.1} parent=1 // pred_check
      _
    $region59: #{encoder_forward.1} parent=1 // pred_check_branch
      %421 = sbr.rel (0) target = $region61
    $region60: #{encoder_forward.1} parent=1 // pred_region
      %s423 = ssub.s32 256, 256
      %424 = vsyncadd [#allocation4], %s423
      %s425 = sshll.u32 [#allocation14], 4
      %s426 = int_to_ptr.vmem [resolvable:$true] %s425
      %431 = dma.vmem_to_hbm [thread:$0]  %s426, 256, %s7, [#allocation4], 128, 128, 8
    $region61: #{encoder_forward.1} parent=1 // pred_fallthru
      _
    // Predicated region
    $region62: #{encoder_forward.1} parent=1 // pred_check
      _
    $region63: #{encoder_forward.1} parent=1 // pred_check_branch
      %433 = sbr.rel (0) target = $region65
    $region64: #{encoder_forward.1} parent=1 // pred_region
      %434 = dma.done [#allocation4], 256
    $region65: #{encoder_forward.1} parent=1 // pred_fallthru
      _
    %435 = vsyncpa [#allocation3], 1
    %436 = vsyncpa [#allocation6], 1
    %437 = vsyncpa [#allocation9], 1
    %438 = vsyncpa [#allocation12], 1
    %439 = vsyncpa [#allocation4], 1

</llo_original>
